<compile_context>
chip_gen: v5e
topology: v5e:2x2
jax: 0.10.0
libtpu: 0.0.40
codegen_flags: <defaults>
</compile_context>

<pallas_src>
import functools
import numpy as np

import jax
import jax.numpy as jnp
from jax import lax
from jax.experimental import pallas as pl
from jax.experimental.pallas import tpu as pltpu

EPS = 1e-8
SLOPE = 0.2            # LeakyReLU negative slope
RGB_PAD = 128          # rgb kept lane-dense (128 channels) through the pipeline
TARGET_TILE_HW = 1024  # ~rows*cols per conv tile (v6e default; ~512 on v7x,
                       #  ~256-512 on v5e)


def _leaky(x):
    return jnp.maximum(x, SLOPE * x)


def _query_vmem_limit():
    try:
        cap = pltpu.get_tpu_info().vmem_capacity_bytes
        return int(min(48 * 1024 * 1024, (cap * 3) // 4))
    except Exception:
        return None


_VMEM_LIMIT = _query_vmem_limit()


def _cparams(dims):
    return pltpu.CompilerParams(dimension_semantics=dims,
                                vmem_limit_bytes=_VMEM_LIMIT)


def _pick_pow2_tile(n, cap):
    t = min(n, cap)
    if n % t:
        t = n
    return t


def _pick_tile_h(H, W):
    # all spatial sizes in this model are powers of two
    t = min(H, max(8, TARGET_TILE_HW // max(W, 1)))
    if H % t:
        t = H
    return t


# --------------------------------------------------------------------------
# Kernel A: fused mapping network (pixel-norm + L x (Linear + LeakyReLU))
# grid over layers; activation stays resident in a VMEM scratch.
# --------------------------------------------------------------------------
def _mapping_kernel(z_ref, w_ref, b_ref, o_ref, h_ref, *, normalize):
    l = pl.program_id(0)

    @pl.when(l == 0)
    def _():
        x0 = z_ref[...].astype(jnp.float32)
        if normalize:  # Normalize_2D: x * rsqrt(mean(x^2, -1) + eps)
            ms = jnp.mean(x0 * x0, axis=-1, keepdims=True) + EPS
            x0 = x0 * lax.rsqrt(ms)
        h_ref[...] = x0

    x = h_ref[...]
    y = _leaky(jnp.dot(x, w_ref[0], preferred_element_type=jnp.float32)
               + b_ref[0])
    h_ref[...] = y

    @pl.when(l == pl.num_programs(0) - 1)
    def _():
        o_ref[...] = y


def mapping_forward(z, wstack, bstack, *, normalize=True):
    L, D, _ = wstack.shape
    B = z.shape[0]
    return pl.pallas_call(
        functools.partial(_mapping_kernel, normalize=normalize),
        out_shape=jax.ShapeDtypeStruct((B, D), jnp.float32),
        grid=(L,),
        in_specs=[
            pl.BlockSpec((B, D), lambda l: (0, 0)),
            pl.BlockSpec((1, D, D), lambda l: (l, 0, 0)),
            pl.BlockSpec((1, 1, D), lambda l: (l, 0, 0)),
        ],
        out_specs=pl.BlockSpec((B, D), lambda l: (0, 0)),
        scratch_shapes=[pltpu.VMEM((B, D), jnp.float32)],
        compiler_params=_cparams(("arbitrary",)),
    )(z, wstack, bstack)


# --------------------------------------------------------------------------
# Kernel B: per-layer style + demodulation coefficients (tiny matmuls, hoisted
# out of the per-tile conv kernel): styles = ws @ A_w + A_b,
# d = rsqrt(styles^2 @ sum_taps(w^2) + eps).
# --------------------------------------------------------------------------
def _style_kernel(ws_ref, aw_ref, ab_ref, wsq_ref, s_ref, d_ref):
    s = jnp.dot(ws_ref[...], aw_ref[...],
                preferred_element_type=jnp.float32) + ab_ref[...]
    s_ref[...] = s
    d_ref[...] = lax.rsqrt(
        jnp.dot(s * s, wsq_ref[...], preferred_element_type=jnp.float32) + EPS)


def style_and_demod(ws, p):
    B = ws.shape[0]
    Cin = p["A_w"].shape[1]
    Cout = p["wsq"].shape[1]
    s, d = pl.pallas_call(
        _style_kernel,
        out_shape=(jax.ShapeDtypeStruct((B, Cin), jnp.float32),
                   jax.ShapeDtypeStruct((B, Cout), jnp.float32)),
    )(ws, p["A_w"], p["A_b"], p["wsq"])
    return s[:, None, :], d[:, None, :]   # (B,1,Cin), (B,1,Cout)


# --------------------------------------------------------------------------
# Kernel C: 3x3 modulated/demodulated conv + noise + LeakyReLU.
# grid = (batch, row-tiles).  The padded input stays in HBM (pl.ANY); a halo
# tile (TILE_H+2, W+2, Cin) is DMA'd into VMEM and the conv is 9 shifted bf16
# matmuls accumulated in f32 (no im2col materialization).
# --------------------------------------------------------------------------
def _conv3x3_kernel(xpad_hbm, s_ref, d_ref, n_ref, bm_ref, w_ref, o_ref,
                    xbuf, sem):
    b = pl.program_id(0)
    t = pl.program_id(1)
    tile_h, W, Cout = o_ref.shape[1], o_ref.shape[2], o_ref.shape[3]
    Cin = xbuf.shape[-1]

    # halo DMA: padded rows [t*tile_h, t*tile_h + tile_h + 2)
    row0 = pl.multiple_of(t * tile_h, tile_h)
    cp = pltpu.make_async_copy(xpad_hbm.at[b, pl.ds(row0, tile_h + 2)],
                               xbuf, sem)
    cp.start()
    cp.wait()
    # TODO(synk): double-buffer this halo DMA (prefetch tile t+1) to hide it
    # behind the matmuls; kept synchronous so both grid axes stay "parallel".

    # modulate once, cast dot operands to bf16 (f32 accumulation)
    xm = (xbuf[...] * s_ref[...]).astype(jnp.bfloat16)      # (tile_h+2, W+2, Cin)

    acc = jnp.zeros((tile_h * W, Cout), jnp.float32)
    for dy in range(3):
        for dx in range(3):
            xs = xm[dy:dy + tile_h, dx:dx + W, :].reshape(tile_h * W, Cin)
            acc = acc + jnp.dot(xs, w_ref[dy, dx],
                                preferred_element_type=jnp.float32)

    y = acc * d_ref[0]                                      # demodulation (1, Cout)
    y = y.reshape(tile_h, W, Cout)
    y = y + n_ref[0][:, :, None] * bm_ref[...]              # B * noise (B zero-init)
    o_ref[0] = _leaky(y)


def conv3x3_mod(x, ws, p, noise_key):
    B, H, W, Cin = x.shape
    Cout = p["w"].shape[-1]
    styles, d = style_and_demod(ws, p)
    xpad = jnp.pad(x, ((0, 0), (1, 1), (1, 1), (0, 0)))     # 'same' padding, once
    noise = jax.random.normal(noise_key, (B, H, W), dtype=jnp.float32)
    tile_h = _pick_tile_h(H, W)
    return pl.pallas_call(
        _conv3x3_kernel,
        out_shape=jax.ShapeDtypeStruct((B, H, W, Cout), jnp.float32),
        grid=(B, H // tile_h),
        in_specs=[
            pl.BlockSpec(memory_space=pl.ANY),                           # padded x (HBM)
            pl.BlockSpec((1, 1, Cin), lambda b, t: (b, 0, 0)),           # style
            pl.BlockSpec((1, 1, Cout), lambda b, t: (b, 0, 0)),          # demod coefs
            pl.BlockSpec((1, tile_h, W), lambda b, t: (b, t, 0)),        # noise tile
            pl.BlockSpec((1, 1, Cout), lambda b, t: (0, 0, 0)),          # Bmod
            pl.BlockSpec((3, 3, Cin, Cout), lambda b, t: (0, 0, 0, 0)),  # weight (bf16)
        ],
        out_specs=pl.BlockSpec((1, tile_h, W, Cout), lambda b, t: (b, t, 0, 0)),
        scratch_shapes=[
            pltpu.VMEM((tile_h + 2, W + 2, Cin), jnp.float32),
            pltpu.SemaphoreType.DMA(()),
        ],
        compiler_params=_cparams(("parallel", "parallel")),
    )(xpad, styles, d, noise, p["Bmod"], p["w"])


# --------------------------------------------------------------------------
# Kernel D: 1x1 modulated tRGB conv + noise + LeakyReLU + fused residual add
# into the lane-padded rgb buffer.  Fully BlockSpec-pipelined, grid=(B, tiles).
# --------------------------------------------------------------------------
def _trgb_mod_kernel(x_ref, s_ref, d_ref, n_ref, bm_ref, w_ref, rgb_ref, o_ref):
    _, tile_h, W, Cf = x_ref.shape
    C = o_ref.shape[-1]
    xm = (x_ref[0] * s_ref[...]).astype(jnp.bfloat16).reshape(tile_h * W, Cf)
    y = jnp.dot(xm, w_ref[...], preferred_element_type=jnp.float32)
    y = (y * d_ref[0]).reshape(tile_h, W, C)
    y = y + n_ref[0][:, :, None] * bm_ref[...]
    o_ref[0] = rgb_ref[0] + _leaky(y)


def trgb_mod(x, rgb, ws, p, noise_key):
    B, H, W, Cf = x.shape
    C = p["w"].shape[-1]                       # RGB_PAD (lane-dense)
    styles, d = style_and_demod(ws, p)
    noise = jax.random.normal(noise_key, (B, H, W), dtype=jnp.float32)
    tile_h = _pick_tile_h(H, W)
    # TODO(synk): fuse this 1x1 projection into the preceding conv3x3 epilogue
    # to avoid re-reading the feature map from HBM.
    return pl.pallas_call(
        _trgb_mod_kernel,
        out_shape=jax.ShapeDtypeStruct((B, H, W, C), jnp.float32),
        grid=(B, H // tile_h),
        in_specs=[
            pl.BlockSpec((1, tile_h, W, Cf), lambda b, t: (b, t, 0, 0)),
            pl.BlockSpec((1, 1, Cf), lambda b, t: (b, 0, 0)),
            pl.BlockSpec((1, 1, C), lambda b, t: (b, 0, 0)),
            pl.BlockSpec((1, tile_h, W), lambda b, t: (b, t, 0)),
            pl.BlockSpec((1, 1, C), lambda b, t: (0, 0, 0)),
            pl.BlockSpec((Cf, C), lambda b, t: (0, 0)),
            pl.BlockSpec((1, tile_h, W, C), lambda b, t: (b, t, 0, 0)),
        ],
        out_specs=pl.BlockSpec((1, tile_h, W, C), lambda b, t: (b, t, 0, 0)),
        compiler_params=_cparams(("parallel", "parallel")),
    )(x, styles, d, noise, p["Bmod"], p["w"], rgb)


# --------------------------------------------------------------------------
# Kernel E: plain 1x1 tRGB conv (last block) + bias + LeakyReLU + residual add.
# --------------------------------------------------------------------------
def _trgb_plain_kernel(x_ref, w_ref, b_ref, rgb_ref, o_ref):
    _, tile_h, W, Cf = x_ref.shape
    C = o_ref.shape[-1]
    x = x_ref[0].astype(jnp.bfloat16).reshape(tile_h * W, Cf)
    y = jnp.dot(x, w_ref[...], preferred_element_type=jnp.float32) + b_ref[...]
    o_ref[0] = rgb_ref[0] + _leaky(y).reshape(tile_h, W, C)


def trgb_plain(x, rgb, w, b):
    B, H, W, Cf = x.shape
    C = w.shape[-1]
    tile_h = _pick_tile_h(H, W)
    return pl.pallas_call(
        _trgb_plain_kernel,
        out_shape=jax.ShapeDtypeStruct((B, H, W, C), jnp.float32),
        grid=(B, H // tile_h),
        in_specs=[
            pl.BlockSpec((1, tile_h, W, Cf), lambda b_, t: (b_, t, 0, 0)),
            pl.BlockSpec((Cf, C), lambda b_, t: (0, 0)),
            pl.BlockSpec((1, C), lambda b_, t: (0, 0)),
            pl.BlockSpec((1, tile_h, W, C), lambda b_, t: (b_, t, 0, 0)),
        ],
        out_specs=pl.BlockSpec((1, tile_h, W, C), lambda b_, t: (b_, t, 0, 0)),
        compiler_params=_cparams(("parallel", "parallel")),
    )(x, w, b, rgb)


# --------------------------------------------------------------------------
# Kernel F: separable bilinear 2x upsample (align_corners=True).
# One small interpolation matrix per spatial axis; each stage is a plain 2D
# matmul along axis 1, tiled over (batch, other-spatial, channels).
# --------------------------------------------------------------------------
def _bilinear_matrix(n_in, n_out):
    M = np.zeros((n_out, n_in), dtype=np.float32)
    scale = (n_in - 1) / (n_out - 1)
    for i in range(n_out):
        pos = i * scale
        i0 = int(np.floor(pos))
        i1 = min(i0 + 1, n_in - 1)
        f = pos - i0
        M[i, i0] += 1.0 - f
        M[i, i1] += f
    return M


def _upsample_axis1_kernel(x_ref, m_ref, o_ref):
    _, n_in, tm, tc = x_ref.shape
    n_out = m_ref.shape[0]
    x2 = x_ref[0].reshape(n_in, tm * tc)
    y = jnp.dot(m_ref[...], x2, preferred_element_type=jnp.float32)
    o_ref[0] = y.reshape(n_out, tm, tc)


def _upsample_axis1(x, m_np):
    B, N_in, M, C = x.shape
    N_out = m_np.shape[0]
    tile_m = _pick_pow2_tile(M, 256)
    tile_c = _pick_pow2_tile(C, 128)
    return pl.pallas_call(
        _upsample_axis1_kernel,
        out_shape=jax.ShapeDtypeStruct((B, N_out, M, C), jnp.float32),
        grid=(B, M // tile_m, C // tile_c),
        in_specs=[
            pl.BlockSpec((1, N_in, tile_m, tile_c), lambda b, m, c: (b, 0, m, c)),
            pl.BlockSpec((N_out, N_in), lambda b, m, c: (0, 0)),
        ],
        out_specs=pl.BlockSpec((1, N_out, tile_m, tile_c),
                               lambda b, m, c: (b, 0, m, c)),
        compiler_params=_cparams(("parallel", "parallel", "parallel")),
    )(x, jnp.asarray(m_np))


def upsample2x(x):
    B, H, W, C = x.shape
    # TODO(synk): tile the upsampled (N_in) axis too for very large resolutions.
    t = _upsample_axis1(x, _bilinear_matrix(H, 2 * H))      # (B, 2H, W, C)
    t = jnp.swapaxes(t, 1, 2)                               # layout glue
    u = _upsample_axis1(t, _bilinear_matrix(W, 2 * W))      # (B, 2W, 2H, C)
    return jnp.swapaxes(u, 1, 2)                            # (B, 2H, 2W, C)


# --------------------------------------------------------------------------
# Parameter construction (mirrors the PyTorch __init__ shapes; conv weights
# stored channels-last, rgb projections zero-padded to RGB_PAD lanes).
# --------------------------------------------------------------------------
def generate_map_channels(out_res, start_res=4, max_channels=512):
    base = 16 * 1024
    m, k = {}, start_res
    while k <= out_res:
        m[k] = min(base // k, max_channels)
        k *= 2
    return m


def init_generator(key, *, res, start_res, max_channels, latent_size,
                   deep_mapping, rgb_channels):
    map_ch = generate_map_channels(res, start_res, max_channels)
    keys = iter(jax.random.split(key, 512))

    def normal(shape, std):
        return jax.random.normal(next(keys), shape, jnp.float32) * std

    def xavier(shape, fan_in, fan_out):
        return normal(shape, np.sqrt(2.0 / (fan_in + fan_out)))

    def conv3_params(cin, cout):
        w = xavier((3, 3, cin, cout), cin * 9, cout * 9)
        return {
            "A_w": normal((latent_size, cin), 1.0 / np.sqrt(latent_size)),
            "A_b": normal((1, cin), 0.01),
            "w": w.astype(jnp.bfloat16),
            "wsq": jnp.sum(w * w, axis=(0, 1)),            # (cin, cout), f32
            "Bmod": jnp.zeros((1, 1, cout), jnp.float32),  # torch.zeros(out_ch)
        }

    def trgb_mod_params(cin):
        w = xavier((cin, rgb_channels), cin, rgb_channels)
        w = jnp.pad(w, ((0, 0), (0, RGB_PAD - rgb_channels)))  # lane-dense rgb
        return {
            "A_w": normal((latent_size, cin), 1.0 / np.sqrt(latent_size)),
            "A_b": normal((1, cin), 0.01),
            "w": w.astype(jnp.bfloat16),
            "wsq": w * w,                                   # k=1 -> (cin, RGB_PAD)
            "Bmod": jnp.zeros((1, 1, RGB_PAD), jnp.float32),
        }

    params = {
        "mapping_w": jnp.stack([xavier((latent_size, latent_size),
                                       latent_size, latent_size)
                                for _ in range(deep_mapping)]),
        "mapping_b": jnp.zeros((deep_mapping, 1, latent_size), jnp.float32),
        "const": jnp.ones((start_res, start_res, max_channels), jnp.float32),
    }

    specs = [(start_res, start_res, max_channels, map_ch[start_res], False)]
    to_res = 2 * start_res
    while to_res <= res:
        cur = to_res // 2
        specs.append((cur, to_res, map_ch[cur], map_ch[to_res], to_res == res))
        to_res *= 2

    blocks = []
    for rin, rout, cin, cout, is_last in specs:
        blk = {"res_in": rin, "res_out": rout, "is_last": is_last,
               "conv1": conv3_params(cin, cin),
               "conv2": conv3_params(cin, cout)}
        if is_last:
            wt = xavier((cout, rgb_channels), cout, rgb_channels)
            blk["trgb_w"] = jnp.pad(
                wt, ((0, 0), (0, RGB_PAD - rgb_channels))).astype(jnp.bfloat16)
            blk["trgb_b"] = jnp.zeros((1, RGB_PAD), jnp.float32)
        else:
            blk["trgb"] = trgb_mod_params(cout)
        blocks.append(blk)
    params["blocks"] = blocks
    return params


# --------------------------------------------------------------------------
# Generator forward
# --------------------------------------------------------------------------
def generator_forward(params, z, noise_key, *, rgb_channels, start_res):
    B = z.shape[0]

    w = mapping_forward(z, params["mapping_w"], params["mapping_b"],
                        normalize=True)

    img = jnp.broadcast_to(params["const"][None], (B,) + params["const"].shape)
    rgb = jnp.zeros((B, start_res, start_res, RGB_PAD), jnp.float32)

    nkeys = iter(jax.random.split(noise_key, 3 * len(params["blocks"])))
    for blk in params["blocks"]:
        if blk["res_out"] == 2 * blk["res_in"]:
            img = upsample2x(img)
            rgb = upsample2x(rgb)
        img = conv3x3_mod(img, w, blk["conv1"], next(nkeys))
        img = conv3x3_mod(img, w, blk["conv2"], next(nkeys))
        if blk["is_last"]:
            rgb = trgb_plain(img, rgb, blk["trgb_w"], blk["trgb_b"])
        else:
            rgb = trgb_mod(img, rgb, w, blk["trgb"], next(nkeys))

    # slice lane-padded rgb back to 3 channels; return PyTorch NCHW layout
    return jnp.transpose(rgb[..., :rgb_channels], (0, 3, 1, 2))


if __name__ == "__main__":
    # Small configuration consistent with the module's constraints
    # (res a power of 2, 4 <= res <= 1024).
    RES = 16
    START_RES = 4
    MAX_CHANNELS = 64
    LATENT = 32
    DEEP_MAPPING = 8
    RGB_CHANNELS = 3
    BATCH = 2

    root = jax.random.PRNGKey(0)
    k_params, k_z, k_noise = jax.random.split(root, 3)

    params = init_generator(k_params, res=RES, start_res=START_RES,
                            max_channels=MAX_CHANNELS, latent_size=LATENT,
                            deep_mapping=DEEP_MAPPING, rgb_channels=RGB_CHANNELS)

    z = jax.random.normal(k_z, (BATCH, LATENT), dtype=jnp.float32)

    out = generator_forward(params, z, k_noise,
                            rgb_channels=RGB_CHANNELS, start_res=START_RES)
    out = jax.block_until_ready(out)
    assert out.shape == (BATCH, RGB_CHANNELS, RES, RES), out.shape
    assert bool(jnp.all(jnp.isfinite(out)))
    print("KERNEL_OK")
</pallas_src>

<mosaic_0001>
module attributes {stable_mosaic.version = 11 : i64} {
  func.func @_mapping_kernel(%arg0: i32, %arg1: memref<2x32xf32, #tpu.memory_space<vmem>>, %arg2: memref<1x32x32xf32, #tpu.memory_space<vmem>>, %arg3: memref<1x1x32xf32, #tpu.memory_space<vmem>>, %arg4: memref<2x32xf32, #tpu.memory_space<vmem>>, %arg5: memref<2x32xf32, #tpu.memory_space<vmem>>) attributes {dimension_semantics = [#tpu.dimension_semantics<arbitrary>], iteration_bounds = array<i64: 8>, scalar_prefetch = 0 : i64, scratch_operands = 1 : i64, tpu.core_type = #tpu.core_type<tc>, window_params = [{pipeline_mode = #tpu.pipeline_mode<synchronous>, transform_indices = @transform_0, window_bounds = array<i64: 2, 32>}, {transform_indices = @transform_1, window_bounds = array<i64: 1, 32, 32>}, {transform_indices = @transform_2, window_bounds = array<i64: 1, 1, 32>}, {pipeline_mode = #tpu.pipeline_mode<synchronous>, transform_indices = @transform_3, window_bounds = array<i64: 2, 32>}]} {
    %c0_i32 = arith.constant 0 : i32
    %0 = arith.cmpi eq, %arg0, %c0_i32 : i32
    %1 = arith.extui %0 : i1 to i32
    %c0_i32_0 = arith.constant 0 : i32
    %2 = arith.cmpi ne, %1, %c0_i32_0 : i32
    scf.if %2 {
      %c0_12 = arith.constant 0 : index
      %c0_13 = arith.constant 0 : index
      %18 = vector.load %arg1[%c0_12, %c0_13] : memref<2x32xf32, #tpu.memory_space<vmem>>, vector<2x32xf32>
      %19 = arith.mulf %18, %18 : vector<2x32xf32>
      %cst_14 = arith.constant dense<0.000000e+00> : vector<2xf32>
      %20 = vector.multi_reduction <add>, %19, %cst_14 [1] : vector<2x32xf32> to vector<2xf32>
      %21 = vector.shape_cast %20 : vector<2xf32> to vector<2x1xf32>
      %cst_15 = arith.constant 3.200000e+01 : f32
      %22 = vector.broadcast %cst_15 : f32 to vector<2x1xf32>
      %23 = arith.divf %21, %22 : vector<2x1xf32>
      %cst_16 = arith.constant 9.99999993E-9 : f32
      %24 = vector.broadcast %cst_16 : f32 to vector<2x1xf32>
      %25 = arith.addf %23, %24 : vector<2x1xf32>
      %26 = math.rsqrt %25 : vector<2x1xf32>
      %27 = vector.broadcast %26 : vector<2x1xf32> to vector<2x32xf32>
      %28 = arith.mulf %18, %27 : vector<2x32xf32>
      %c0_17 = arith.constant 0 : index
      %c0_18 = arith.constant 0 : index
      %29 = vector.load %arg5[%c0_17, %c0_18] : memref<2x32xf32, #tpu.memory_space<vmem>>, vector<2x32xf32>
      tpu.vector_store %arg5[%c0_17, %c0_18], %28 {strides = array<i32>} : memref<2x32xf32, #tpu.memory_space<vmem>>, vector<2x32xf32>,
    } else {
    }
    %c0 = arith.constant 0 : index
    %c0_1 = arith.constant 0 : index
    %3 = vector.load %arg5[%c0, %c0_1] : memref<2x32xf32, #tpu.memory_space<vmem>>, vector<2x32xf32>
    %c0_2 = arith.constant 0 : index
    %c0_3 = arith.constant 0 : index
    %c0_4 = arith.constant 0 : index
    %4 = vector.load %arg2[%c0_2, %c0_3, %c0_4] : memref<1x32x32xf32, #tpu.memory_space<vmem>>, vector<1x32x32xf32>
    %5 = vector.shape_cast %4 : vector<1x32x32xf32> to vector<32x32xf32>
    %cst = arith.constant dense<0.000000e+00> : vector<2x32xf32>
    %6 = tpu.matmul %3, %5, %cst {dimension_numbers = #tpu.dot_dimension_numbers<[1], [0], [0], [1], [0, 0, 1, 1], [], []>} : vector<2x32xf32>, vector<32x32xf32>, vector<2x32xf32> -> vector<2x32xf32>
    %c0_5 = arith.constant 0 : index
    %c0_6 = arith.constant 0 : index
    %c0_7 = arith.constant 0 : index
    %7 = vector.load %arg3[%c0_5, %c0_6, %c0_7] : memref<1x1x32xf32, #tpu.memory_space<vmem>>, vector<1x1x32xf32>
    %8 = vector.shape_cast %7 : vector<1x1x32xf32> to vector<1x32xf32>
    %9 = vector.broadcast %8 : vector<1x32xf32> to vector<2x32xf32>
    %10 = arith.addf %6, %9 : vector<2x32xf32>
    %cst_8 = arith.constant 2.000000e-01 : f32
    %11 = vector.broadcast %cst_8 : f32 to vector<2x32xf32>
    %12 = arith.mulf %11, %10 : vector<2x32xf32>
    %13 = arith.maximumf %10, %12 : vector<2x32xf32>
    %c0_9 = arith.constant 0 : index
    %c0_10 = arith.constant 0 : index
    %14 = vector.load %arg5[%c0_9, %c0_10] : memref<2x32xf32, #tpu.memory_space<vmem>>, vector<2x32xf32>
    tpu.vector_store %arg5[%c0_9, %c0_10], %13 {strides = array<i32>} : memref<2x32xf32, #tpu.memory_space<vmem>>, vector<2x32xf32>,
    %c7_i32 = arith.constant 7 : i32
    %15 = arith.cmpi eq, %arg0, %c7_i32 : i32
    %16 = arith.extui %15 : i1 to i32
    %c0_i32_11 = arith.constant 0 : i32
    %17 = arith.cmpi ne, %16, %c0_i32_11 : i32
    scf.if %17 {
      %c0_12 = arith.constant 0 : index
      %c0_13 = arith.constant 0 : index
      %18 = vector.load %arg4[%c0_12, %c0_13] : memref<2x32xf32, #tpu.memory_space<vmem>>, vector<2x32xf32>
      tpu.vector_store %arg4[%c0_12, %c0_13], %13 {strides = array<i32>} : memref<2x32xf32, #tpu.memory_space<vmem>>, vector<2x32xf32>,
    } else {
    }
    return
  }
  func.func @transform_0(%arg0: i32) -> (i32, i32) {
    %c0_i32 = arith.constant 0 : i32
    %c0_i32_0 = arith.constant 0 : i32
    %c0_i32_1 = arith.constant 0 : i32
    return %c0_i32, %c0_i32_0 : i32, i32
  }
  func.func @transform_1(%arg0: i32) -> (i32, i32, i32) {
    %c0_i32 = arith.constant 0 : i32
    %c0_i32_0 = arith.constant 0 : i32
    %c0_i32_1 = arith.constant 0 : i32
    return %arg0, %c0_i32, %c0_i32_0 : i32, i32, i32
  }
  func.func @transform_2(%arg0: i32) -> (i32, i32, i32) {
    %c0_i32 = arith.constant 0 : i32
    %c0_i32_0 = arith.constant 0 : i32
    %c0_i32_1 = arith.constant 0 : i32
    return %arg0, %c0_i32, %c0_i32_0 : i32, i32, i32
  }
  func.func @transform_3(%arg0: i32) -> (i32, i32) {
    %c0_i32 = arith.constant 0 : i32
    %c0_i32_0 = arith.constant 0 : i32
    %c0_i32_1 = arith.constant 0 : i32
    return %c0_i32, %c0_i32_0 : i32, i32
  }
}

</mosaic_0001>

<llo_original>
// kernel: tpu_custom_call.1
$region0: #{tpu_custom_call.1}
  #allocation0 [shape = 'u32[]', space=smem, size = 0x4, offset = 0x4, fixed_abs, tag = 'smem constant byte address 0x4 - core index']
  #allocation1 [shape = 'u32[72,128]{1,0:T(1,128)}', space=vmem, size = 0x9000, scoped, tag = 'internal scratch']
  #allocation2 [shape = 'f32[2,32]{1,0:T(2,128)}', space=vmem, size = 0x400, scoped, tag = 'scratch operand']
  %s0 = inlined_call_operand.hbm [shape: f32[2,32], index: 0, kind: input, shape index: {}]
  %s1 = inlined_call_operand.hbm [shape: f32[8,32,32], index: 1, kind: input, shape index: {}]
  %s2 = inlined_call_operand.hbm [shape: f32[8,1,32], index: 2, kind: input, shape index: {}]
  %s3 = inlined_call_operand.hbm [shape: f32[2,32], index: 3, kind: output, shape index: {}]
  %s4 = sld [smem:[#allocation0]]
  $region65: #{tpu_custom_call.1} parent=0
    _
  %s6 = ssub.s32 1, %s4
  %s7 = scalar_select 0, %s6, %s4
  $region1: #{tpu_custom_call.1} parent=0
    #allocation3 [shape = 'u8[1024]{0}', space=vmem, size = 0x400, scoped, tag = 'input window, operand 0, single buffered']
    #allocation4 [shape = 's32[2]{0}', space=sflag, size = 0x8, scoped, tag = 'scoped memory for tpu_custom_call.1']
    #allocation5 [shape = 's32[2]{0}', space=sflag, size = 0x8, scoped, tag = 'scoped memory for tpu_custom_call.1']
    #allocation6 [shape = 'u8[32768]{0}', space=vmem, size = 0x8000, scoped, tag = 'input window, operand 1']
    #allocation7 [shape = 's32[2]{0}', space=sflag, size = 0x8, scoped, tag = 'scoped memory for tpu_custom_call.1']
    #allocation8 [shape = 'u8[1024]{0}', space=vmem, size = 0x400, scoped, tag = 'input window, operand 2']
    #allocation9 [shape = 'u8[1024]{0}', space=vmem, size = 0x400, scoped, tag = 'output window, operand 0, single buffered']
    %8 = vsyncpa [#allocation4], 0
    %9 = vsyncpa [#allocation7], 0
    %s10 = scalar_lea.sflag [#allocation7], 1
    %11 = vsyncpa %s10, 0
    %12 = vsyncpa [#allocation5], 0
    loop: start=0, step=1, limit=10
    $region2: #{tpu_custom_call.1} parent=1 // loop_pre_header
      _
    $region3: #{tpu_custom_call.1} parent=1 // loop_header
      %s14 = sphi 0, %s18
      %p15 = scmp.ge.s32.totalorder %s14, 10
      %s22 = sphi 0, %s22
      %s24 = sphi 0, %s22
      %s25 = sphi 0, %s24
      %s39 = sphi 0, %s25
      %s45 = sphi 0, %s47
      %s48 = sphi 0, %s45
      %s49 = sphi 0, %s48
      %s65 = sphi 0, %s49
      %s71 = sphi 0, %s73
      %s74 = sphi 0, %s71
      %s75 = sphi 0, %s74
      %s91 = sphi 0, %s75
      %s95 = sphi 0, %s95
      %s97 = sphi 0, %s95
      %s98 = sphi 0, %s97
      %s112 = sphi 0, %s98
    $region4: #{tpu_custom_call.1} parent=1 // loop_header_branch
      %17 = sbr.rel (%p15) target = $region8
    $region5: #{tpu_custom_call.1} parent=1 // loop_body
      %s19 = ssub.s32 %s14, 1
      %s20 = ssub.s32 %s14, 2
      %s21 = sadd.s32 %s14, 1
      %s23 = sadd.s32 %s22, 1
      %p26 = scmp.eq.s32.totalorder %s14, 7
      %p27 = scmp.ne.s32.totalorder %s22, %s24
      %p28 = scmp.eq.s32.totalorder %s14, 0
      %p29 = por %p27, %p28
      %p30 = scmp.ne.s32.totalorder %s22, %s24
      %p31 = scmp.eq.s32.totalorder %s19, 7
      %p32 = por %p30, %p31
      %p33 = scmp.ne.s32.totalorder %s24, %s25
      %p34 = scmp.eq.s32.totalorder %s19, 0
      %p35 = por %p33, %p34
      %p36 = scmp.ne.s32.totalorder %s24, %s25
      %p37 = scmp.eq.s32.totalorder %s20, 7
      %p38 = por %p36, %p37
      %p40 = scmp.ne.s32.totalorder %s25, %s39
      %p41 = scmp.eq.s32.totalorder %s20, 0
      %p42 = por %p40, %p41
      %s43 = ssub.s32 %s14, %s21
      %p44 = scmp.eq.s32.totalorder %s43, 0
      %s46 = sadd.s32 %s45, 1
      %s47 = scalar_select %p44, %s45, %s46
      %p50 = pneg %p44
      %p51 = scmp.eq.s32.totalorder %s14, 7
      %p52 = por %p50, %p51
      %p53 = scmp.ne.s32.totalorder %s45, %s48
      %p54 = scmp.eq.s32.totalorder %s14, 0
      %p55 = por %p53, %p54
      %p56 = scmp.ne.s32.totalorder %s45, %s48
      %p57 = scmp.eq.s32.totalorder %s19, 7
      %p58 = por %p56, %p57
      %p59 = scmp.ne.s32.totalorder %s48, %s49
      %p60 = scmp.eq.s32.totalorder %s19, 0
      %p61 = por %p59, %p60
      %p62 = scmp.ne.s32.totalorder %s48, %s49
      %p63 = scmp.eq.s32.totalorder %s20, 7
      %p64 = por %p62, %p63
      %p66 = scmp.ne.s32.totalorder %s49, %s65
      %p67 = scmp.eq.s32.totalorder %s20, 0
      %p68 = por %p66, %p67
      %s69 = ssub.s32 %s14, %s21
      %p70 = scmp.eq.s32.totalorder %s69, 0
      %s72 = sadd.s32 %s71, 1
      %s73 = scalar_select %p70, %s71, %s72
      %p76 = pneg %p70
      %p77 = scmp.eq.s32.totalorder %s14, 7
      %p78 = por %p76, %p77
      %p79 = scmp.ne.s32.totalorder %s71, %s74
      %p80 = scmp.eq.s32.totalorder %s14, 0
      %p81 = por %p79, %p80
      %p82 = scmp.ne.s32.totalorder %s71, %s74
      %p83 = scmp.eq.s32.totalorder %s19, 7
      %p84 = por %p82, %p83
      %p85 = scmp.ne.s32.totalorder %s74, %s75
      %p86 = scmp.eq.s32.totalorder %s19, 0
      %p87 = por %p85, %p86
      %p88 = scmp.ne.s32.totalorder %s74, %s75
      %p89 = scmp.eq.s32.totalorder %s20, 7
      %p90 = por %p88, %p89
      %p92 = scmp.ne.s32.totalorder %s75, %s91
      %p93 = scmp.eq.s32.totalorder %s20, 0
      %p94 = por %p92, %p93
      %s96 = sadd.s32 %s95, 1
      %p99 = scmp.eq.s32.totalorder %s14, 7
      %p100 = scmp.ne.s32.totalorder %s95, %s97
      %p101 = scmp.eq.s32.totalorder %s14, 0
      %p102 = por %p100, %p101
      %p103 = scmp.ne.s32.totalorder %s95, %s97
      %p104 = scmp.eq.s32.totalorder %s19, 7
      %p105 = por %p103, %p104
      %p106 = scmp.ne.s32.totalorder %s97, %s98
      %p107 = scmp.eq.s32.totalorder %s19, 0
      %p108 = por %p106, %p107
      %p109 = scmp.ne.s32.totalorder %s97, %s98
      %p110 = scmp.eq.s32.totalorder %s20, 7
      %p111 = por %p109, %p110
      %p113 = scmp.ne.s32.totalorder %s98, %s112
      %p114 = scmp.eq.s32.totalorder %s20, 0
      %p115 = por %p113, %p114
      %p116 = scmp.le.s32.totalorder 1, %s14
      %p117 = scmp.lt.s32.totalorder %s14, 9
      %p118 = pnand %p116, %p117
      %p119 = pneg %p118
      // Predicated region
      $region9: #{tpu_custom_call.1} parent=5 // pred_check
        _
      $region10: #{tpu_custom_call.1} parent=5 // pred_check_branch
        %121 = sbr.rel (%p118) target = $region12
      $region11: #{tpu_custom_call.1} parent=5 // pred_region
        %s122 = ssub.s32 %s14, 1
        // Predicated region
        $region13: #{tpu_custom_call.1} parent=11 // pred_check
          %p123 = pneg %p35
        $region14: #{tpu_custom_call.1} parent=11 // pred_check_branch
          %125 = sbr.rel (%p123) target = $region16
        $region15: #{tpu_custom_call.1} parent=11 // pred_region
          %127 = vsyncadd [#allocation4], 0
          %s129 = sshll.u32 %s0, 4
          %s130 = int_to_ptr.hbm [resolvable:$true] %s129
          %s131 = sshll.u32 [#allocation3], 4
          %s132 = int_to_ptr.vmem [resolvable:$true] %s131
          %134 = dma.hbm_to_vmem [thread:$0]  %s130, 32, %s132, [#allocation4]
        $region16: #{tpu_custom_call.1} parent=11 // pred_fallthru
          _
      $region12: #{tpu_custom_call.1} parent=5 // pred_fallthru
        _
      %p135 = scmp.lt.s32.totalorder %s14, 8
      // Predicated region
      $region17: #{tpu_custom_call.1} parent=5 // pred_check
        %p136 = pneg %p135
      $region18: #{tpu_custom_call.1} parent=5 // pred_check_branch
        %138 = sbr.rel (%p136) target = $region20
      $region19: #{tpu_custom_call.1} parent=5 // pred_region
        // Predicated region
        $region21: #{tpu_custom_call.1} parent=19 // pred_check
          %p139 = pneg %p55
        $region22: #{tpu_custom_call.1} parent=19 // pred_check_branch
          %141 = sbr.rel (%p139) target = $region24
        $region23: #{tpu_custom_call.1} parent=19 // pred_region
          %s142 = sand.u32 %s14, 1
          %s143 = scalar_lea.sflag [#allocation7], %s142
          %s144 = sand.u32 %s45, 1
          %s145 = smul.addr %s144, 32
          %s146 = scalar_lea.vmem [#allocation6], %s145
          %148 = vsyncadd %s143, 0
          %s149 = smul.addr %s14, 4
          %s150 = smul.addr %s149, 8
          %s151 = scalar_lea.hbm %s1, %s150
          %s152 = sshll.u32 %s151, 4
          %s153 = int_to_ptr.hbm [resolvable:$true] %s152
          %s154 = sshll.u32 %s146, 4
          %s155 = int_to_ptr.vmem [resolvable:$true] %s154
          %160 = dma.hbm_to_vmem [thread:$0]  %s153, 512, %s155, %s143, 128, 128, 8
        $region24: #{tpu_custom_call.1} parent=19 // pred_fallthru
          _
        // Predicated region
        $region25: #{tpu_custom_call.1} parent=19 // pred_check
          %p161 = pneg %p81
        $region26: #{tpu_custom_call.1} parent=19 // pred_check_branch
          %163 = sbr.rel (%p161) target = $region28
        $region27: #{tpu_custom_call.1} parent=19 // pred_region
          %s164 = sand.u32 %s14, 1
          %s165 = scalar_lea.sflag [#allocation7], %s164
          %s166 = sand.u32 %s71, 1
          %s167 = scalar_lea.vmem [#allocation8], %s166
          %169 = vsyncadd %s165, 0
          %s170 = scalar_lea.hbm %s2, %s14
          %s172 = sshll.u32 %s170, 4
          %s173 = int_to_ptr.hbm [resolvable:$true] %s172
          %s174 = sshll.u32 %s167, 4
          %s175 = int_to_ptr.vmem [resolvable:$true] %s174
          %177 = dma.hbm_to_vmem [thread:$0]  %s173, 16, %s175, %s165
        $region28: #{tpu_custom_call.1} parent=19 // pred_fallthru
          _
      $region20: #{tpu_custom_call.1} parent=5 // pred_fallthru
        _
      %p178 = scmp.le.s32.totalorder 1, %s14
      %p179 = scmp.lt.s32.totalorder %s14, 9
      %p180 = pnand %p178, %p179
      %p181 = pneg %p180
      // Predicated region
      $region29: #{tpu_custom_call.1} parent=5 // pred_check
        _
      $region30: #{tpu_custom_call.1} parent=5 // pred_check_branch
        %183 = sbr.rel (%p180) target = $region32
      $region31: #{tpu_custom_call.1} parent=5 // pred_region
        %s184 = ssub.s32 %s14, 1
        // Predicated region
        $region33: #{tpu_custom_call.1} parent=31 // pred_check
          %p185 = pneg %p35
        $region34: #{tpu_custom_call.1} parent=31 // pred_check_branch
          %187 = sbr.rel (%p185) target = $region36
        $region35: #{tpu_custom_call.1} parent=31 // pred_region
          %189 = dma.done [#allocation4], 32
        $region36: #{tpu_custom_call.1} parent=31 // pred_fallthru
          _
        %s190 = sand.u32 %s19, 1
        %s191 = scalar_lea.sflag [#allocation7], %s190
        %s192 = sand.u32 %s48, 1
        %s193 = smul.addr %s192, 32
        %s194 = scalar_lea.vmem [#allocation6], %s193
        // Predicated region
        $region37: #{tpu_custom_call.1} parent=31 // pred_check
          %p195 = pneg %p61
        $region38: #{tpu_custom_call.1} parent=31 // pred_check_branch
          %197 = sbr.rel (%p195) target = $region40
        $region39: #{tpu_custom_call.1} parent=31 // pred_region
          %199 = dma.done %s191, 512
        $region40: #{tpu_custom_call.1} parent=31 // pred_fallthru
          _
        %s200 = sand.u32 %s19, 1
        %s201 = scalar_lea.sflag [#allocation7], %s200
        %s202 = sand.u32 %s74, 1
        %s203 = scalar_lea.vmem [#allocation8], %s202
        // Predicated region
        $region41: #{tpu_custom_call.1} parent=31 // pred_check
          %p204 = pneg %p87
        $region42: #{tpu_custom_call.1} parent=31 // pred_check_branch
          %206 = sbr.rel (%p204) target = $region44
        $region43: #{tpu_custom_call.1} parent=31 // pred_region
          %208 = dma.done %s201, 16
        $region44: #{tpu_custom_call.1} parent=31 // pred_fallthru
          _
        %p209 = pneg %p35
        %p210 = pneg %p32
        %s211 = sand.u32 %s19, 1
        %s212 = scalar_lea.sflag [#allocation7], %s211
        %s213 = sand.u32 %s48, 1
        %s214 = smul.addr %s213, 32
        %s215 = scalar_lea.vmem [#allocation6], %s214
        %p216 = pneg %p61
        %p217 = pneg %p58
        %s218 = sand.u32 %s19, 1
        %s219 = scalar_lea.sflag [#allocation7], %s218
        %s220 = sand.u32 %s74, 1
        %s221 = scalar_lea.vmem [#allocation8], %s220
        %p222 = pneg %p87
        %p223 = pneg %p84
        %p224 = pneg %p108
        %p225 = pneg %p105
        %p226 = scmp.eq.s32.totalorder %s19, 0
        // Predicated region
        $region45: #{tpu_custom_call.1} parent=31 // pred_check
          %p227 = pneg %p226
        $region46: #{tpu_custom_call.1} parent=31 // pred_check_branch
          %229 = sbr.rel (%p227) target = $region48
        $region47: #{tpu_custom_call.1} parent=31 // pred_region
          %v230 = vld [vmem:[#allocation3] sm:$0x3]
          %v231 = vmul.f32 %v230, %v230
          %vm232 = vcmask 254976
          %v233 = vsel %vm232, %v231, 0.0
          %234 = vadd.xlane.f32.xlu0 %v233
          %v235 = vpop.xlane.xlu0 %234
          %v236 = vrcp.pop 32.0
          %v237 = vmul.f32 32.0, %v236
          %v238 = vsub.f32 1.0, %v237
          %v239 = vmul.f32 %v236, %v238
          %v240 = vadd.f32 %v236, %v239
          %vm241 = vweird.f32 %v236
          %v242 = vsel %vm241, %v236, %v240
          %v243 = vmul.f32 %v235, %v242
          %v244 = vadd.f32 %v243, 1e-08
          %v245 = vrsqrt.pop %v244
          %v246 = vmul.f32 %v245, %v244
          %v247 = vmul.f32 %v246, %v245
          %v248 = vmul.f32 0.5, %v247
          %v249 = vsub.f32 1.5, %v248
          %v250 = vmul.f32 %v245, %v249
          %vm251 = vweird.f32 %v244
          %vm252 = vweird.f32 %v245
          %vm253 = vmor %vm251, %vm252
          %v254 = vsel %vm253, %v245, %v250
          %v255 = vmul.f32 %v230, %v254
          %256 = vst.msk [vmem:[#allocation2] sm:$0x3] %vm232, %v255
        $region48: #{tpu_custom_call.1} parent=31 // pred_fallthru
          _
        %v257 = vld [vmem:[#allocation2] sm:$0x3]
        %v258 = vld [vmem:[%s194] sm:$0xff]
        %v259 = vld [vmem:[%s194 + $0x8] sm:$0xff]
        %v260 = vld [vmem:[%s194 + $0x10] sm:$0xff]
        %v261 = vld [vmem:[%s194 + $0x18] sm:$0xff]
        %v262 = vld [vmem:[%s203] sm:$0x1]
        %v264 = vperm.slane %v262, 0
        %vm266 = vcmask 261120
        %v268 = vsel %vm266, %v257, 0
        %270 = vmatpush.msra.mxu0 0.0
        %271 = vmatpush.msra.mxu0 0.0
        %272 = vmatpush.msra.mxu0 0.0
        %273 = vmatpush.msra.mxu0 0.0
        %274 = vmatpush.msra.mxu0 0.0
        %275 = vmatpush.msra.mxu0 0.0
        %276 = vmatpush.msra.mxu0 0.0
        %277 = vmatpush.msra.mxu0 0.0
        %278 = vmatpush.msra.mxu0 0.0
        %279 = vmatpush.msra.mxu0 0.0
        %280 = vmatpush.msra.mxu0 0.0
        %281 = vmatpush.msra.mxu0 0.0
        %282 = vmatpush.msra.mxu0 %v261
        %283 = vmatpush.msra.mxu0 %v260
        %284 = vmatpush.msra.mxu0 %v259
        %285 = vmatpush.msra.mxu0 %v258
        %286 = vmatmul.f32.gmra.mxu0 %v268
        %v287 = vpop.f32.mrf.mxu0
        %v288 = vadd.f32 %v264, %v287
        %289 = vdwg.mxu0
        %v290 = vmul.f32 %v288, 0.2
        %v291 = vmax.f32 %v288, %v290
        %vm292 = vcmask 254976
        %293 = vst.msk [vmem:[#allocation2] sm:$0x3] %vm292, %v291
        %p294 = scmp.eq.s32.totalorder %s19, 7
        // Predicated region
        $region49: #{tpu_custom_call.1} parent=31 // pred_check
          %p295 = pneg %p294
        $region50: #{tpu_custom_call.1} parent=31 // pred_check_branch
          %297 = sbr.rel (%p295) target = $region52
        $region51: #{tpu_custom_call.1} parent=31 // pred_region
          %298 = vst.msk [vmem:[#allocation9] sm:$0x3] %vm292, %v291
        $region52: #{tpu_custom_call.1} parent=31 // pred_fallthru
          _
        // Predicated region
        $region53: #{tpu_custom_call.1} parent=31 // pred_check
          %p299 = pneg %p105
        $region54: #{tpu_custom_call.1} parent=31 // pred_check_branch
          %301 = sbr.rel (%p299) target = $region56
        $region55: #{tpu_custom_call.1} parent=31 // pred_region
          %303 = vsyncadd [#allocation5], 0
          %s305 = sshll.u32 [#allocation9], 4
          %s306 = int_to_ptr.vmem [resolvable:$true] %s305
          %s307 = sshll.u32 %s3, 4
          %s308 = int_to_ptr.hbm [resolvable:$true] %s307
          %310 = dma.vmem_to_hbm [thread:$0]  %s306, 32, %s308, [#allocation5]
        $region56: #{tpu_custom_call.1} parent=31 // pred_fallthru
          _
        // Predicated region
        $region57: #{tpu_custom_call.1} parent=31 // pred_check
          %p311 = pneg %p105
        $region58: #{tpu_custom_call.1} parent=31 // pred_check_branch
          %313 = sbr.rel (%p311) target = $region60
        $region59: #{tpu_custom_call.1} parent=31 // pred_region
          %315 = dma.done [#allocation5], 32
        $region60: #{tpu_custom_call.1} parent=31 // pred_fallthru
          _
      $region32: #{tpu_custom_call.1} parent=5 // pred_fallthru
        _
      %p316 = scmp.le.s32.totalorder 2, %s14
      // Predicated region
      $region61: #{tpu_custom_call.1} parent=5 // pred_check
        %p317 = pneg %p316
      $region62: #{tpu_custom_call.1} parent=5 // pred_check_branch
        %319 = sbr.rel (%p317) target = $region64
      $region63: #{tpu_custom_call.1} parent=5 // pred_region
        %s320 = ssub.s32 %s14, 2
      $region64: #{tpu_custom_call.1} parent=5 // pred_fallthru
        _
    $region6: #{tpu_custom_call.1} parent=1 // loop_footer
      %s18 = sadd.s32 1, %s14
    $region7: #{tpu_custom_call.1} parent=1 // loop_footer_branch
      %13 = sbr.rel target = $region3
    $region8: #{tpu_custom_call.1} parent=1 // loop_exit
      _
    %321 = vsyncpa [#allocation4], 1
    %s322 = scalar_lea.sflag [#allocation4], 1
    %323 = vsyncpa %s322, 1
    %324 = vsyncpa [#allocation7], 1
    %s325 = scalar_lea.sflag [#allocation7], 1
    %326 = vsyncpa %s325, 1
    %327 = vsyncpa [#allocation5], 1
    %s328 = scalar_lea.sflag [#allocation5], 1
    %329 = vsyncpa %s328, 1

</llo_original>
